<compile_context>
chip_gen: v6e
topology: v6e:2x2x1
jax: 0.10.0
libtpu: 0.0.40
codegen_flags: <defaults>
</compile_context>

<pallas_src>
import functools
import math

import jax
import jax.numpy as jnp
import numpy as np
from jax import lax
from jax.experimental import pallas as pl
from jax.experimental.pallas import tpu as pltpu


def _smoothed_bin_loss_kernel(x_ref, t_ref, o_ref, *, num_classes, spillage,
                              gamma, valid_rows, tile_rows):
    """One grid step over rows [i*tile_rows, (i+1)*tile_rows) of the flat input.

    x_ref: (tile_rows, C) logits, natural row-major layout.
    t_ref: (1, tile_rows) int32 bin index per row.
    o_ref: (1, 1, 1) partial sum of the KL pointwise terms for this tile.
    """
    C = num_classes
    s = spillage
    g = float(gamma)
    lng = math.log(g)
    inv_pow = [g ** (-k) for k in range(s + 1)]            # gamma^{-k}
    S = float(sum(inv_pow[1:]))                            # sum_{d=1..s} g^-d

    # Lane-dense layout: rows on the 128-wide lane axis, classes on sublanes.
    x = jnp.transpose(x_ref[...].astype(jnp.float32))      # (C, T)
    t = t_ref[...]                                         # (1, T) int32

    # ---- log-softmax pieces over the class (sublane) axis ----
    xm = x - jnp.max(x, axis=0, keepdims=True)             # (C, T)
    logse = jnp.log(jnp.sum(jnp.exp(xm), axis=0, keepdims=True))   # (1, T)

    # ---- natural (unclamped) smoothed weights: gamma^{-|c-t|} for |c-t|<=s ----
    col = lax.broadcasted_iota(jnp.int32, (C, 1), 0)
    d = col - t
    ad = jnp.maximum(d, -d)                                # |c - t|, (C, T)
    w_nat = jnp.zeros_like(xm)
    for k in range(s, -1, -1):
        w_nat = jnp.where(ad == k, inv_pow[k], w_nat)

    # sum_c w_raw * (x - max); the low-side clamp pileup on class 0 is added
    # per-row below (it is purely additive at column 0).
    s_wx = jnp.sum(w_nat * xm, axis=0, keepdims=True)      # (1, T)

    # ---- per-row compile-time constants (select chains over the target) ----
    # Row loss = sum_c w*(log w - log p) with w = w_raw / z
    #          = inv_z * (A - sum_c w_raw*(x - max)) + logse - log z
    # where A = sum_c w_raw*log(w_raw) and z = sum_c w_raw; both take only a
    # handful of values determined by t, so no full-tile log / divide is needed.
    a_lo_full = sum(inv_pow[dd] * (-dd * lng) for dd in range(1, s + 1))

    tail = jnp.zeros_like(logse)                           # clamp-to-0 extra mass
    a_lo = jnp.full_like(logse, a_lo_full)
    for tau in range(min(s, C)):                           # low side: t = tau < s
        w0 = sum(inv_pow[dd] for dd in range(tau, s + 1))  # merged class-0 mass
        tail_c = sum(inv_pow[dd] for dd in range(tau + 1, s + 1))
        a_lo_c = (sum(inv_pow[dd] * (-dd * lng) for dd in range(1, tau))
                  + w0 * math.log(w0))
        is_tau = t == tau
        tail = jnp.where(is_tau, tail_c, tail)
        a_lo = jnp.where(is_tau, a_lo_c, a_lo)

    z_full = 1.0 + 2.0 * S
    inv_z = jnp.full_like(logse, 1.0 / z_full)
    log_z = jnp.full_like(logse, math.log(z_full))
    a_hi = jnp.full_like(logse, a_lo_full)
    # TODO(synk): torch raises when target + delta > C-1 (out-of-bounds scatter);
    # here (and in the JAX reference) that mass is silently dropped.
    for j in range(s):                                     # high side: t = C-1-j
        if C - 1 - j < 0:
            continue
        z_j = 1.0 + S + sum(inv_pow[dd] for dd in range(1, j + 1))
        a_hi_j = sum(inv_pow[dd] * (-dd * lng) for dd in range(1, j + 1))
        cond = t == (C - 1 - j)
        inv_z = jnp.where(cond, 1.0 / z_j, inv_z)
        log_z = jnp.where(cond, math.log(z_j), log_z)
        a_hi = jnp.where(cond, a_hi_j, a_hi)

    s_wx = s_wx + tail * xm[0:1, :]                        # class-0 pileup term
    loss_row = inv_z * ((a_lo + a_hi) - s_wx) + logse - log_z   # (1, T)

    # Mask rows beyond N (ragged last block reads undefined data) with a select
    # applied after the class reduction, then lane-reduce to one partial.
    grow = (pl.program_id(0) * tile_rows
            + lax.broadcasted_iota(jnp.int32, loss_row.shape, 1))
    loss_row = jnp.where(grow < valid_rows, loss_row, 0.0)

    o_ref[...] = jnp.sum(loss_row, axis=(0, 1), keepdims=True).reshape(1, 1, 1)


def smoothed_bin_loss(logits, target, *, spillage=1, gamma=2.0,
                      block_bytes=8 << 20):
    """Forward of SmoothedBinLoss: KLDivLoss(reduction='mean') against smoothed bins."""
    B, M, C = logits.shape
    assert target.shape == (B, M)
    N = B * M

    # Natural, copy-free layouts: no pad, no transpose before the kernel.
    x = jnp.reshape(logits, (N, C))
    t = jnp.reshape(target, (1, N)).astype(jnp.int32)

    itemsize = jnp.dtype(logits.dtype).itemsize
    lanes = 128 * pl.cdiv(C, 128)          # lane padding of a (tile, C) VMEM block
    # tile_rows sized so one lane-padded logits block ~= block_bytes.
    tile_rows = max(128, (block_bytes // (lanes * itemsize)) // 128 * 128)
    # Prefer >= 2 tiles when the problem allows it (v7x megacore split), and
    # never exceed the problem itself (full-extent block when N is tiny).
    half_rows = max(128, pl.cdiv(pl.cdiv(N, 2), 128) * 128)
    tile_rows = min(tile_rows, half_rows)
    if tile_rows >= N:
        tile_rows = N
    num_tiles = pl.cdiv(N, tile_rows)

    kernel = functools.partial(
        _smoothed_bin_loss_kernel, num_classes=C, spillage=spillage,
        gamma=float(gamma), valid_rows=N, tile_rows=tile_rows)

    # VMEM budget: 2x double-buffered lane-padded x blocks, 2x sublane-padded
    # t blocks, f32 compute temporaries, plus headroom; capped below v7x's
    # 64 MiB physical VMEM.
    blk_x = tile_rows * lanes * itemsize
    blk_t = tile_rows * 8 * 4
    temps = 6 * tile_rows * C * 4
    vmem_limit = int(min(max(2 * (blk_x + blk_t) + temps + (8 << 20), 16 << 20),
                         48 << 20))

    partials = pl.pallas_call(
        kernel,
        out_shape=jax.ShapeDtypeStruct((num_tiles, 1, 1), jnp.float32),
        grid_spec=pltpu.PrefetchScalarGridSpec(
            num_scalar_prefetch=0,
            grid=(num_tiles,),
            in_specs=[
                pl.BlockSpec((tile_rows, C), lambda i: (i, 0)),
                pl.BlockSpec((1, tile_rows), lambda i: (0, i)),
            ],
            out_specs=pl.BlockSpec((1, 1, 1), lambda i: (i, 0, 0)),
        ),
        compiler_params=pltpu.CompilerParams(
            dimension_semantics=("parallel",),
            vmem_limit_bytes=vmem_limit),
    )(x, t)

    # KLDivLoss(reduction='mean') divides by the total element count B*M*C.
    return jnp.sum(partials) / float(N * C)


def _reference_loss(logits, target, spillage=1, gamma=2.0):
    """Pure-JAX reference mirroring the torch module."""
    B, M, C = logits.shape
    col = jnp.arange(C, dtype=jnp.int32)[None, None, :]
    t = target[:, :, None].astype(jnp.int32)
    w = (col == t).astype(jnp.float32)
    for delta in range(1, spillage + 1):
        coef = float(gamma) ** (-delta)
        w = w + (col == jnp.maximum(t - delta, 0)).astype(jnp.float32) * coef
        w = w + (col == jnp.minimum(t + delta, C)).astype(jnp.float32) * coef
    w = w / jnp.sum(w, axis=-1, keepdims=True)
    logp = jax.nn.log_softmax(logits.astype(jnp.float32), axis=-1)
    pt = jnp.where(w > 0, w * (jnp.log(jnp.where(w > 0, w, 1.0)) - logp), 0.0)
    return jnp.sum(pt) / float(B * M * C)


if __name__ == "__main__":
    key = jax.random.PRNGKey(0)
    k_logits, k_target = jax.random.split(key)

    # Small shape consistent with the module: B=2, M=8, C=16 bins.
    B, M, C = 2, 8, 16
    logits = jax.random.normal(k_logits, (B, M, C), dtype=jnp.float32)
    # keep targets in [0, C-2] so torch's scatter would also be in-bounds
    target = jax.random.randint(k_target, (B, M), minval=0, maxval=C - 1,
                                dtype=jnp.int32)

    loss = jax.block_until_ready(
        smoothed_bin_loss(logits, target, spillage=1, gamma=2.0))
    ref = jax.block_until_ready(_reference_loss(logits, target))
    np.testing.assert_allclose(np.asarray(loss), np.asarray(ref),
                               rtol=3e-5, atol=3e-6)

    # Second check: multi-tile, ragged last block (masking), boundary bins
    # (t=0 clamp pileup and t=C-1 high-side drop), tiny forced block size.
    B2, M2, C2 = 4, 300, 16
    k1, k2 = jax.random.split(k_logits)
    logits2 = jax.random.normal(k1, (B2, M2, C2), dtype=jnp.float32)
    target2 = jax.random.randint(k2, (B2, M2), minval=0, maxval=C2,
                                 dtype=jnp.int32)
    loss2 = jax.block_until_ready(
        smoothed_bin_loss(logits2, target2, spillage=1, gamma=2.0,
                          block_bytes=8192))
    ref2 = jax.block_until_ready(_reference_loss(logits2, target2))
    np.testing.assert_allclose(np.asarray(loss2), np.asarray(ref2),
                               rtol=3e-5, atol=3e-6)

    print("KERNEL_OK")
</pallas_src>

<mosaic_0001>
module attributes {stable_mosaic.version = 11 : i64} {
  func.func @_smoothed_bin_loss_kernel(%arg0: i32, %arg1: memref<16x16xf32, #tpu.memory_space<vmem>>, %arg2: memref<1x16xi32, #tpu.memory_space<vmem>>, %arg3: memref<1x1x1xf32, #tpu.memory_space<vmem>>) attributes {dimension_semantics = [#tpu.dimension_semantics<parallel>], iteration_bounds = array<i64: 1>, scalar_prefetch = 0 : i64, scratch_operands = 0 : i64, tpu.core_type = #tpu.core_type<tc>, window_params = [{transform_indices = @transform_0, window_bounds = array<i64: 16, 16>}, {transform_indices = @transform_1, window_bounds = array<i64: 1, 16>}, {transform_indices = @transform_2, window_bounds = array<i64: 1, 1, 1>}]} {
    %c0 = arith.constant 0 : index
    %c0_0 = arith.constant 0 : index
    %0 = vector.load %arg1[%c0, %c0_0] : memref<16x16xf32, #tpu.memory_space<vmem>>, vector<16x16xf32>
    %1 = tpu.transpose %0, [1, 0] : vector<16x16xf32> -> vector<16x16xf32>
    %c0_1 = arith.constant 0 : index
    %c0_2 = arith.constant 0 : index
    %2 = vector.load %arg2[%c0_1, %c0_2] : memref<1x16xi32, #tpu.memory_space<vmem>>, vector<1x16xi32>
    %cst = arith.constant dense<0xFF800000> : vector<16xf32>
    %3 = vector.multi_reduction <maximumf>, %1, %cst [0] : vector<16x16xf32> to vector<16xf32>
    %4 = vector.shape_cast %3 : vector<16xf32> to vector<1x16xf32>
    %5 = vector.broadcast %4 : vector<1x16xf32> to vector<16x16xf32>
    %6 = arith.subf %1, %5 : vector<16x16xf32>
    %7 = math.exp %6 : vector<16x16xf32>
    %cst_3 = arith.constant dense<0.000000e+00> : vector<16xf32>
    %8 = vector.multi_reduction <add>, %7, %cst_3 [0] : vector<16x16xf32> to vector<16xf32>
    %9 = vector.shape_cast %8 : vector<16xf32> to vector<1x16xf32>
    %10 = math.log %9 : vector<1x16xf32>
    %11 = tpu.iota {dimensions = array<i32: 0>} : vector<16x1xi32>
    %12 = vector.broadcast %11 : vector<16x1xi32> to vector<16x16xi32>
    %13 = vector.broadcast %2 : vector<1x16xi32> to vector<16x16xi32>
    %14 = arith.subi %12, %13 : vector<16x16xi32>
    %c0_i32 = arith.constant 0 : i32
    %15 = vector.broadcast %c0_i32 : i32 to vector<16x16xi32>
    %16 = arith.subi %15, %14 : vector<16x16xi32>
    %17 = arith.maxsi %14, %16 : vector<16x16xi32>
    %cst_4 = arith.constant 0.000000e+00 : f32
    %18 = vector.broadcast %cst_4 : f32 to vector<16x16xf32>
    %c1_i32 = arith.constant 1 : i32
    %19 = vector.broadcast %c1_i32 : i32 to vector<16x16xi32>
    %20 = arith.cmpi eq, %17, %19 : vector<16x16xi32>
    %cst_5 = arith.constant 5.000000e-01 : f32
    %21 = vector.broadcast %cst_5 : f32 to vector<16x16xf32>
    %22 = arith.select %20, %21, %18 : vector<16x16xi1>, vector<16x16xf32>
    %c0_i32_6 = arith.constant 0 : i32
    %23 = vector.broadcast %c0_i32_6 : i32 to vector<16x16xi32>
    %24 = arith.cmpi eq, %17, %23 : vector<16x16xi32>
    %cst_7 = arith.constant 1.000000e+00 : f32
    %25 = vector.broadcast %cst_7 : f32 to vector<16x16xf32>
    %26 = arith.select %24, %25, %22 : vector<16x16xi1>, vector<16x16xf32>
    %27 = arith.mulf %26, %6 : vector<16x16xf32>
    %cst_8 = arith.constant dense<0.000000e+00> : vector<16xf32>
    %28 = vector.multi_reduction <add>, %27, %cst_8 [0] : vector<16x16xf32> to vector<16xf32>
    %29 = vector.shape_cast %28 : vector<16xf32> to vector<1x16xf32>
    %cst_9 = arith.constant 0.000000e+00 : f32
    %30 = vector.broadcast %cst_9 : f32 to vector<1x16xf32>
    %cst_10 = arith.constant -0.346573591 : f32
    %31 = vector.broadcast %cst_10 : f32 to vector<1x16xf32>
    %c0_i32_11 = arith.constant 0 : i32
    %32 = vector.broadcast %c0_i32_11 : i32 to vector<1x16xi32>
    %33 = arith.cmpi eq, %2, %32 : vector<1x16xi32>
    %cst_12 = arith.constant 5.000000e-01 : f32
    %34 = vector.broadcast %cst_12 : f32 to vector<1x16xf32>
    %35 = arith.select %33, %34, %30 : vector<1x16xi1>, vector<1x16xf32>
    %cst_13 = arith.constant 0.608197689 : f32
    %36 = vector.broadcast %cst_13 : f32 to vector<1x16xf32>
    %37 = arith.select %33, %36, %31 : vector<1x16xi1>, vector<1x16xf32>
    %cst_14 = arith.constant 5.000000e-01 : f32
    %38 = vector.broadcast %cst_14 : f32 to vector<1x16xf32>
    %cst_15 = arith.constant 0.693147182 : f32
    %39 = vector.broadcast %cst_15 : f32 to vector<1x16xf32>
    %cst_16 = arith.constant -0.346573591 : f32
    %40 = vector.broadcast %cst_16 : f32 to vector<1x16xf32>
    %c15_i32 = arith.constant 15 : i32
    %41 = vector.broadcast %c15_i32 : i32 to vector<1x16xi32>
    %42 = arith.cmpi eq, %2, %41 : vector<1x16xi32>
    %cst_17 = arith.constant 0.666666686 : f32
    %43 = vector.broadcast %cst_17 : f32 to vector<1x16xf32>
    %44 = arith.select %42, %43, %38 : vector<1x16xi1>, vector<1x16xf32>
    %cst_18 = arith.constant 0.405465096 : f32
    %45 = vector.broadcast %cst_18 : f32 to vector<1x16xf32>
    %46 = arith.select %42, %45, %39 : vector<1x16xi1>, vector<1x16xf32>
    %c0_i32_19 = arith.constant 0 : i32
    %47 = arith.sitofp %c0_i32_19 : i32 to f32
    %48 = vector.broadcast %47 : f32 to vector<1x16xf32>
    %49 = arith.select %42, %48, %40 : vector<1x16xi1>, vector<1x16xf32>
    %50 = vector.extract_strided_slice %6 {offsets = [0, 0], sizes = [1, 16], strides = [1, 1]} : vector<16x16xf32> to vector<1x16xf32>
    %51 = arith.mulf %35, %50 : vector<1x16xf32>
    %52 = arith.addf %29, %51 : vector<1x16xf32>
    %53 = arith.addf %37, %49 : vector<1x16xf32>
    %54 = arith.subf %53, %52 : vector<1x16xf32>
    %55 = arith.mulf %44, %54 : vector<1x16xf32>
    %56 = arith.addf %55, %10 : vector<1x16xf32>
    %57 = arith.subf %56, %46 : vector<1x16xf32>
    %c16_i32 = arith.constant 16 : i32
    %58 = arith.muli %arg0, %c16_i32 : i32
    %59 = tpu.iota {dimensions = array<i32: 1>} : vector<1x16xi32>
    %60 = vector.broadcast %58 : i32 to vector<1x16xi32>
    %61 = arith.addi %60, %59 : vector<1x16xi32>
    %c16_i32_20 = arith.constant 16 : i32
    %62 = vector.broadcast %c16_i32_20 : i32 to vector<1x16xi32>
    %63 = arith.cmpi slt, %61, %62 : vector<1x16xi32>
    %cst_21 = arith.constant 0.000000e+00 : f32
    %64 = vector.broadcast %cst_21 : f32 to vector<1x16xf32>
    %65 = arith.select %63, %57, %64 : vector<1x16xi1>, vector<1x16xf32>
    %66 = vector.shape_cast %65 : vector<1x16xf32> to vector<1x1x16xf32>
    %cst_22 = arith.constant dense<0.000000e+00> : vector<1xf32>
    %67 = vector.multi_reduction <add>, %66, %cst_22 [1, 2] : vector<1x1x16xf32> to vector<1xf32>
    %68 = vector.shape_cast %67 : vector<1xf32> to vector<1x1x1xf32>
    %69 = vector.extract %68[0, 0, 0] : f32 from vector<1x1x1xf32>
    %70 = vector.broadcast %69 : f32 to vector<1x1xf32>
    %71 = vector.shape_cast %70 : vector<1x1xf32> to vector<1x1x1xf32>
    %c0_23 = arith.constant 0 : index
    %c0_24 = arith.constant 0 : index
    %c0_25 = arith.constant 0 : index
    %72 = vector.load %arg3[%c0_23, %c0_24, %c0_25] : memref<1x1x1xf32, #tpu.memory_space<vmem>>, vector<1x1x1xf32>
    tpu.vector_store %arg3[%c0_23, %c0_24, %c0_25], %71 {strides = array<i32>} : memref<1x1x1xf32, #tpu.memory_space<vmem>>, vector<1x1x1xf32>,
    return
  }
  func.func @transform_0(%arg0: i32) -> (i32, i32) {
    %c0_i32 = arith.constant 0 : i32
    %c0_i32_0 = arith.constant 0 : i32
    return %arg0, %c0_i32 : i32, i32
  }
  func.func @transform_1(%arg0: i32) -> (i32, i32) {
    %c0_i32 = arith.constant 0 : i32
    %c0_i32_0 = arith.constant 0 : i32
    return %c0_i32, %arg0 : i32, i32
  }
  func.func @transform_2(%arg0: i32) -> (i32, i32, i32) {
    %c0_i32 = arith.constant 0 : i32
    %c0_i32_0 = arith.constant 0 : i32
    %c0_i32_1 = arith.constant 0 : i32
    return %arg0, %c0_i32, %c0_i32_0 : i32, i32, i32
  }
}

</mosaic_0001>

<llo_original>
// kernel: tpu_custom_call.1
$region0: #{tpu_custom_call.1}
  #allocation0 [shape = 'u32[]', space=smem, size = 0x4, offset = 0x4, fixed_abs, tag = 'smem constant byte address 0x4 - core index']
  #allocation1 [shape = 'u32[144,128]{1,0:T(1,128)}', space=vmem, size = 0x12000, scoped, tag = 'internal scratch']
  %s0 = inlined_call_operand.hbm [shape: f32[16,16], index: 0, kind: input, shape index: {}]
  %s1 = inlined_call_operand.vmem [shape: s32[1,16], index: 1, kind: input, shape index: {}]
  %s2 = inlined_call_operand.hbm [shape: f32[1,1,1], index: 2, kind: output, shape index: {}]
  %s3 = sld [smem:[#allocation0]]
  $region22: #{tpu_custom_call.1} parent=0
    _
  %s5 = ssub.s32 1, %s3
  %s6 = scalar_select 0, %s5, %s3
  $region1: #{tpu_custom_call.1} parent=0
    #allocation2 [shape = 'u8[8192]{0}', space=vmem, size = 0x2000, scoped, tag = 'input window, operand 0, single buffered']
    #allocation3 [shape = 's32[1]{0}', space=sflag, size = 0x4, scoped, tag = 'scoped memory for tpu_custom_call.1']
    #allocation4 [shape = 's32[1]{0}', space=sflag, size = 0x4, scoped, tag = 'scoped memory for tpu_custom_call.1']
    #allocation5 [shape = 'u8[512]{0}', space=vmem, size = 0x400, scoped, tag = 'output window, operand 0, single buffered']
    %7 = vsyncpa [#allocation3], 0
    %8 = vsyncpa [#allocation4], 0
    // Predicated region
    $region2: #{tpu_custom_call.1} parent=1 // pred_check
      _
    $region3: #{tpu_custom_call.1} parent=1 // pred_check_branch
      %10 = sbr.rel (0) target = $region5
    $region4: #{tpu_custom_call.1} parent=1 // pred_region
      %s12 = ssub.s32 256, 256
      %13 = vsyncadd [#allocation3], %s12
      %s14 = sshll.u32 [#allocation2], 4
      %s15 = int_to_ptr.vmem [resolvable:$true] %s14
      %20 = dma.hbm_to_vmem [thread:$0]  %s0, 256, %s15, [#allocation3], 128, 128, 8
    $region5: #{tpu_custom_call.1} parent=1 // pred_fallthru
      _
    // Predicated region
    $region6: #{tpu_custom_call.1} parent=1 // pred_check
      _
    $region7: #{tpu_custom_call.1} parent=1 // pred_check_branch
      %22 = sbr.rel (0) target = $region9
    $region8: #{tpu_custom_call.1} parent=1 // pred_region
      _
    $region9: #{tpu_custom_call.1} parent=1 // pred_fallthru
      _
    // Predicated region
    $region10: #{tpu_custom_call.1} parent=1 // pred_check
      _
    $region11: #{tpu_custom_call.1} parent=1 // pred_check_branch
      %24 = sbr.rel (0) target = $region13
    $region12: #{tpu_custom_call.1} parent=1 // pred_region
      %25 = dma.done [#allocation3], 256
    $region13: #{tpu_custom_call.1} parent=1 // pred_fallthru
      _
    %v26 = vld [vmem:[#allocation2] sm:$0xff]
    %v27 = vld [vmem:[#allocation2 + $0x8] sm:$0xff]
    %28 = vxpose.xlu0.b32.start [1/16] %v26, 128
    %29 = vxpose.xlu0.b32.cont [2/16] %v27, 128
    %30 = vxpose.xlu0.b32.cont [3/16] 0.0, 128
    %31 = vxpose.xlu0.b32.cont [4/16] 0.0, 128
    %32 = vxpose.xlu0.b32.cont [5/16] 0.0, 128
    %33 = vxpose.xlu0.b32.cont [6/16] 0.0, 128
    %34 = vxpose.xlu0.b32.cont [7/16] 0.0, 128
    %35 = vxpose.xlu0.b32.cont [8/16] 0.0, 128
    %36 = vxpose.xlu0.b32.cont [9/16] 0.0, 128
    %37 = vxpose.xlu0.b32.cont [10/16] 0.0, 128
    %38 = vxpose.xlu0.b32.cont [11/16] 0.0, 128
    %39 = vxpose.xlu0.b32.cont [12/16] 0.0, 128
    %40 = vxpose.xlu0.b32.cont [13/16] 0.0, 128
    %41 = vxpose.xlu0.b32.cont [14/16] 0.0, 128
    %42 = vxpose.xlu0.b32.cont [15/16] 0.0, 128
    %43 = vxpose.xlu0.b32.end [16/16] 0.0, 128
    %v44 = vpop.trf.xlu0
    %v45 = vpop.trf.xlu0
    %v46 = vpop.trf.xlu0
    %v47 = vpop.trf.xlu0
    %v48 = vpop.trf.xlu0
    %v49 = vpop.trf.xlu0
    %v50 = vpop.trf.xlu0
    %v51 = vpop.trf.xlu0
    %v52 = vpop.trf.xlu0
    %v53 = vpop.trf.xlu0
    %v54 = vpop.trf.xlu0
    %v55 = vpop.trf.xlu0
    %v56 = vpop.trf.xlu0
    %v57 = vpop.trf.xlu0
    %v58 = vpop.trf.xlu0
    %v59 = vpop.trf.xlu0
    %v60 = vld [vmem:[%s1] sm:$0x1]
    %vm61 = vcmask 130048
    %v62 = vsel %vm61, %v44, -inf
    %v63 = vsel %vm61, %v45, -inf
    %v64 = vmax.f32 %v62, %v63
    %v65 = vrot.slane %v64, 4
    %v66 = vmax.f32 %v64, %v65
    %v67 = vrot.slane %v66, 2
    %v68 = vmax.f32 %v66, %v67
    %v69 = vrot.slane %v68, 1
    %v70 = vmax.f32 %v68, %v69
    %v71 = vsub.f32 %v44, %v70
    %v72 = vsub.f32 %v45, %v70
    %v73 = vmul.f32 %v71, 1.442695
    %v74 = vpow.pop %v73
    %v75 = vmul.f32 %v72, 1.442695
    %v76 = vpow.pop %v75
    %v77 = vsel %vm61, %v74, 0.0
    %v78 = vsel %vm61, %v76, 0.0
    %v79 = vadd.f32 %v77, %v78
    %v80 = vrot.slane %v79, 4
    %v81 = vadd.f32 %v79, %v80
    %v82 = vrot.slane %v81, 2
    %v83 = vadd.f32 %v81, %v82
    %v84 = vrot.slane %v83, 1
    %v85 = vadd.f32 %v83, %v84
    %v86 = vlog2.pop %v85
    %v87 = vmul.f32 %v86, 0.6931472
    %v88 = vlaneseq
    %v89 = vshrl.u32 %v88, 7
    %v90 = vadd.s32 %v89, 8
    %v91 = vlaneseq
    %v92 = vshrl.u32 %v91, 7
    %v93 = vsub.s32 0, %v92
    %v94 = vrot.slane %v60, %v93
    %v95 = vsub.s32 %v89, %v94
    %v96 = vsub.s32 %v90, %v94
    %v97 = vsub.s32 0, %v95
    %v98 = vsub.s32 0, %v96
    %vm99 = vcmp.gt.s32.totalorder %v95, %v97
    %v100 = vsel %vm99, %v95, %v97
    %vm101 = vcmp.gt.s32.totalorder %v96, %v98
    %v102 = vsel %vm101, %v96, %v98
    %vm103 = vcmp.eq.s32.totalorder %v100, 1
    %vm104 = vcmp.eq.s32.totalorder %v102, 1
    %v105 = vsel %vm103, 0.5, 0.0
    %v106 = vsel %vm104, 0.5, 0.0
    %vm107 = vcmp.eq.s32.totalorder %v100, 0
    %vm108 = vcmp.eq.s32.totalorder %v102, 0
    %v109 = vsel %vm107, 1.0, %v105
    %v110 = vsel %vm108, 1.0, %v106
    %v111 = vmul.f32 %v109, %v71
    %v112 = vmul.f32 %v110, %v72
    %v113 = vsel %vm61, %v111, 0.0
    %v114 = vsel %vm61, %v112, 0.0
    %v115 = vadd.f32 %v113, %v114
    %v116 = vrot.slane %v115, 4
    %v117 = vadd.f32 %v115, %v116
    %v118 = vrot.slane %v117, 2
    %v119 = vadd.f32 %v117, %v118
    %v120 = vrot.slane %v119, 1
    %v121 = vadd.f32 %v119, %v120
    %vm122 = vcmp.eq.s32.totalorder %v60, 0
    %v123 = vsel %vm122, 0.5, 0.0
    %v124 = vsel %vm122, 0.6081977, -0.3465736
    %vm125 = vcmp.eq.s32.totalorder %v60, 15
    %v126 = vsel %vm125, 0.6666667, 0.5
    %v127 = vsel %vm125, 0.4054651, 0.6931472
    %v128 = vsel %vm125, 0.0, -0.3465736
    %v129 = vmul.f32 %v123, %v71
    %v130 = vadd.f32 %v121, %v129
    %v131 = vadd.f32 %v124, %v128
    %v132 = vsub.f32 %v131, %v130
    %v133 = vmul.f32 %v126, %v132
    %v134 = vadd.f32 %v133, %v87
    %v135 = vsub.f32 %v134, %v127
    %s136 = smul.u32 0, 16
    %v137 = vlaneseq
    %v138 = vand.u32 %v137, 127
    %v139 = vstv %s136
    %v140 = vadd.s32 %v139, %v138
    %vm141 = vcmp.lt.s32.totalorder %v140, 16
    %v142 = vsel %vm141, %v135, 0.0
    %vm143 = vcmask 122880
    %v144 = vsel %vm143, %v142, 0.0
    %145 = vadd.xlane.f32.xlu0 %v144
    %v146 = vpop.xlane.xlu0 %145
    %v147 = vrot.slane %v146, 4
    %v148 = vadd.f32 %v146, %v147
    %v149 = vrot.slane %v148, 2
    %v150 = vadd.f32 %v148, %v149
    %v151 = vrot.slane %v150, 1
    %v152 = vadd.f32 %v150, %v151
    %s153 = vtos %v152
    %v154 = vstv %s153
    %vm155 = vcmask 0
    %156 = vst.msk [vmem:[#allocation5] sm:$0x1] %vm155, %v154
    // Predicated region
    $region14: #{tpu_custom_call.1} parent=1 // pred_check
      _
    $region15: #{tpu_custom_call.1} parent=1 // pred_check_branch
      %158 = sbr.rel (0) target = $region17
    $region16: #{tpu_custom_call.1} parent=1 // pred_region
      %s160 = ssub.s32 16, 16
      %161 = vsyncadd [#allocation4], %s160
      %s163 = sshll.u32 [#allocation5], 4
      %s164 = int_to_ptr.vmem [resolvable:$true] %s163
      %166 = dma.vmem_to_hbm [thread:$0]  %s164, 16, %s2, [#allocation4]
    $region17: #{tpu_custom_call.1} parent=1 // pred_fallthru
      _
    // Predicated region
    $region18: #{tpu_custom_call.1} parent=1 // pred_check
      _
    $region19: #{tpu_custom_call.1} parent=1 // pred_check_branch
      %168 = sbr.rel (0) target = $region21
    $region20: #{tpu_custom_call.1} parent=1 // pred_region
      %169 = dma.done [#allocation4], 16
    $region21: #{tpu_custom_call.1} parent=1 // pred_fallthru
      _
    %170 = vsyncpa [#allocation3], 1
    %171 = vsyncpa [#allocation4], 1

</llo_original>
